<compile_context>
chip_gen: v7x
topology: tpu7x:2x2x1
jax: 0.10.0
libtpu: 0.0.40
codegen_flags: <defaults>
</compile_context>

<pallas_src>
import jax
import jax.numpy as jnp
from jax.experimental import pallas as pl
from jax.experimental.pallas import tpu as pltpu

IN_DIM = 28 * 28          # 784 (multiple of 8 sublanes; full-dim block -> no lane pad)
HID_DIM = 128
OUT_DIM = 10
OUT_PAD = 128             # lane-dense classifier output; sliced to 10 in the wrapper
MAX_TILE_B = 1024         # double-buffered f32 x tile ~6 MB + outputs ~1.5 MB < 16 MiB


def _round_up(v, m):
    return ((v + m - 1) // m) * m


def _mlp_kernel(x_ref, w1_ref, b1_ref, w2_ref, b2_ref, logits_ref, feats_ref):
    # x_ref:      [TILE_B, 784]  f32   (cast to bf16 in-kernel)
    # w1_ref:     [784, 128]     bf16
    # b1_ref:     [1, 128]       f32
    # w2_ref:     [128, 128]     bf16  (cols 10:128 zero)
    # b2_ref:     [1, 128]       f32   (cols 10:128 zero)
    # logits_ref: [TILE_B, 128]  f32
    # feats_ref:  [TILE_B, 128]  bf16
    x = x_ref[...].astype(jnp.bfloat16)        # VPU cast; free under the HBM roofline

    # features_layer: Linear(784, 128) + ReLU  (bf16 MXU, f32 accumulate)
    h = jnp.dot(x, w1_ref[...], preferred_element_type=jnp.float32)
    feats = jnp.maximum(h + b1_ref[...], 0.0)  # f32 epilogue (v5e-friendly)
    feats_ref[...] = feats.astype(feats_ref.dtype)

    # classifier: Linear(128, 10) padded to a full 128-wide MXU pass
    logits = jnp.dot(feats.astype(w2_ref.dtype), w2_ref[...],
                     preferred_element_type=jnp.float32)
    logits_ref[...] = (logits + b2_ref[...]).astype(logits_ref.dtype)


def prepare_params(w1, b1, w2, b2):
    """One-time weight prep (transpose, bf16 cast, lane-pad the classifier).

    torch Linear stores weight as [out, in]; the kernel wants [in, out].
    Hoisted out of the per-call forward so it is not repeated every step.
    """
    w1_t = jnp.asarray(w1).T.astype(jnp.bfloat16)               # [784, 128]
    b1_r = jnp.asarray(b1).reshape(1, HID_DIM).astype(jnp.float32)
    w2_p = jnp.zeros((HID_DIM, OUT_PAD), jnp.bfloat16)
    w2_p = w2_p.at[:, :OUT_DIM].set(jnp.asarray(w2).T.astype(jnp.bfloat16))
    b2_p = jnp.zeros((1, OUT_PAD), jnp.float32)
    b2_p = b2_p.at[0, :OUT_DIM].set(jnp.asarray(b2).astype(jnp.float32))
    return w1_t, b1_r, w2_p, b2_p


@jax.jit
def mnist_inception_forward(x, w1_t, b1_r, w2_p, b2_p):
    """x: [B, 1, 28, 28] f32 (torch NCHW). Returns (logits [B,10], feats [B,128])."""
    b = x.shape[0]
    x_flat = x.reshape(b, -1)                                   # same as torch .view(b, -1)

    # --- batch tile: multiple of 16, >=2 grid steps when the batch allows it
    #     (megacore sharding on v7x), capped so tiles stay well inside VMEM.
    tile_b = max(16, min(MAX_TILE_B, _round_up(-(-b // 2), 16)))
    b_pad = _round_up(b, tile_b)
    grid_b = b_pad // tile_b
    if b_pad != b:
        # only the batch dim is padded; no column pad / dtype pre-pass on x
        x_flat = jnp.pad(x_flat, ((0, b_pad - b), (0, 0)))

    flops = 2 * b_pad * (IN_DIM * HID_DIM + HID_DIM * OUT_PAD)
    bytes_accessed = (b_pad * IN_DIM * 4              # x f32 read
                      + IN_DIM * HID_DIM * 2          # w1 bf16
                      + HID_DIM * OUT_PAD * 2         # w2 bf16
                      + (HID_DIM + OUT_PAD) * 4       # biases
                      + b_pad * OUT_PAD * 4           # logits f32 write
                      + b_pad * HID_DIM * 2)          # feats bf16 write

    logits_p, feats_p = pl.pallas_call(
        _mlp_kernel,
        out_shape=(
            jax.ShapeDtypeStruct((b_pad, OUT_PAD), jnp.float32),
            jax.ShapeDtypeStruct((b_pad, HID_DIM), jnp.bfloat16),
        ),
        grid=(grid_b,),
        in_specs=[
            pl.BlockSpec((tile_b, IN_DIM), lambda i: (i, 0)),     # x tiles over batch
            pl.BlockSpec((IN_DIM, HID_DIM), lambda i: (0, 0)),    # weights stay resident
            pl.BlockSpec((1, HID_DIM), lambda i: (0, 0)),
            pl.BlockSpec((HID_DIM, OUT_PAD), lambda i: (0, 0)),
            pl.BlockSpec((1, OUT_PAD), lambda i: (0, 0)),
        ],
        out_specs=(
            pl.BlockSpec((tile_b, OUT_PAD), lambda i: (i, 0)),
            pl.BlockSpec((tile_b, HID_DIM), lambda i: (i, 0)),
        ),
        compiler_params=pltpu.CompilerParams(
            dimension_semantics=("parallel",),                    # megacore on v7x
        ),
        cost_estimate=pl.CostEstimate(
            flops=flops, transcendentals=0, bytes_accessed=bytes_accessed),
    )(x_flat, w1_t, b1_r, w2_p, b2_p)

    # strip batch + lane padding (small; keeps the module's f32/(B,10)/(B,128) contract)
    logits = logits_p[:b, :OUT_DIM]
    feats = feats_p[:b].astype(jnp.float32)
    return logits, feats


def _reference_forward(x, w1, b1, w2, b2):
    b = x.shape[0]
    xf = x.reshape(b, -1)
    feats = jnp.maximum(xf @ w1.T + b1, 0.0)
    logits = feats @ w2.T + b2
    return logits, feats


if __name__ == "__main__":
    key = jax.random.PRNGKey(0)
    kx, k1, k2, k3, k4 = jax.random.split(key, 5)

    batch = 2
    # Input matches the module contract: [batch, 1, 28, 28]
    x = jax.random.normal(kx, (batch, 1, 28, 28), dtype=jnp.float32)

    # torch Linear shapes: weight [out, in], bias [out]
    w1 = jax.random.normal(k1, (HID_DIM, IN_DIM), dtype=jnp.float32) * 0.02
    b1 = jax.random.normal(k2, (HID_DIM,), dtype=jnp.float32) * 0.02
    w2 = jax.random.normal(k3, (OUT_DIM, HID_DIM), dtype=jnp.float32) * 0.02
    b2 = jax.random.normal(k4, (OUT_DIM,), dtype=jnp.float32) * 0.02

    params = prepare_params(w1, b1, w2, b2)        # one-time weight prep
    logits, feats = mnist_inception_forward(x, *params)
    jax.block_until_ready((logits, feats))

    ref_logits, ref_feats = _reference_forward(x, w1, b1, w2, b2)
    assert logits.shape == (batch, OUT_DIM) and feats.shape == (batch, HID_DIM)
    # bf16 operands (and bf16 feats writeback) with f32 accumulation -> loosened tolerance.
    # Note: logits are computed from bf16(feats), so logits != returned_feats @ w2 exactly.
    assert jnp.allclose(logits, ref_logits, atol=5e-2, rtol=5e-2)
    assert jnp.allclose(feats, ref_feats, atol=5e-2, rtol=5e-2)

    print("KERNEL_OK")
</pallas_src>

<mosaic_0001>
module attributes {stable_mosaic.version = 11 : i64} {
  func.func @_mlp_kernel(%arg0: i32, %arg1: memref<16x784xf32, #tpu.memory_space<vmem>>, %arg2: memref<784x128xbf16, #tpu.memory_space<vmem>>, %arg3: memref<1x128xf32, #tpu.memory_space<vmem>>, %arg4: memref<128x128xbf16, #tpu.memory_space<vmem>>, %arg5: memref<1x128xf32, #tpu.memory_space<vmem>>, %arg6: memref<16x128xf32, #tpu.memory_space<vmem>>, %arg7: memref<16x128xbf16, #tpu.memory_space<vmem>>) attributes {dimension_semantics = [#tpu.dimension_semantics<parallel>], iteration_bounds = array<i64: 1>, scalar_prefetch = 0 : i64, scratch_operands = 0 : i64, tpu.core_type = #tpu.core_type<tc>, window_params = [{transform_indices = @transform_0, window_bounds = array<i64: 16, 784>}, {pipeline_mode = #tpu.pipeline_mode<synchronous>, transform_indices = @transform_1, window_bounds = array<i64: 784, 128>}, {pipeline_mode = #tpu.pipeline_mode<synchronous>, transform_indices = @transform_2, window_bounds = array<i64: 1, 128>}, {pipeline_mode = #tpu.pipeline_mode<synchronous>, transform_indices = @transform_3, window_bounds = array<i64: 128, 128>}, {pipeline_mode = #tpu.pipeline_mode<synchronous>, transform_indices = @transform_4, window_bounds = array<i64: 1, 128>}, {transform_indices = @transform_5, window_bounds = array<i64: 16, 128>}, {transform_indices = @transform_6, window_bounds = array<i64: 16, 128>}]} {
    %c0 = arith.constant 0 : index
    %c0_0 = arith.constant 0 : index
    %0 = vector.load %arg1[%c0, %c0_0] : memref<16x784xf32, #tpu.memory_space<vmem>>, vector<16x784xf32>
    %1 = arith.truncf %0 : vector<16x784xf32> to vector<16x784xbf16>
    %c0_1 = arith.constant 0 : index
    %c0_2 = arith.constant 0 : index
    %2 = vector.load %arg2[%c0_1, %c0_2] : memref<784x128xbf16, #tpu.memory_space<vmem>>, vector<784x128xbf16>
    %cst = arith.constant dense<0.000000e+00> : vector<16x128xf32>
    %3 = tpu.matmul %1, %2, %cst {dimension_numbers = #tpu.dot_dimension_numbers<[1], [0], [0], [1], [0, 0, 1, 1], [], []>} : vector<16x784xbf16>, vector<784x128xbf16>, vector<16x128xf32> -> vector<16x128xf32>
    %c0_3 = arith.constant 0 : index
    %c0_4 = arith.constant 0 : index
    %4 = vector.load %arg3[%c0_3, %c0_4] : memref<1x128xf32, #tpu.memory_space<vmem>>, vector<1x128xf32>
    %5 = vector.broadcast %4 : vector<1x128xf32> to vector<16x128xf32>
    %6 = arith.addf %3, %5 : vector<16x128xf32>
    %cst_5 = arith.constant 0.000000e+00 : f32
    %7 = vector.broadcast %cst_5 : f32 to vector<16x128xf32>
    %8 = arith.maximumf %6, %7 : vector<16x128xf32>
    %9 = arith.truncf %8 : vector<16x128xf32> to vector<16x128xbf16>
    %c0_6 = arith.constant 0 : index
    %c0_7 = arith.constant 0 : index
    %10 = vector.load %arg7[%c0_6, %c0_7] : memref<16x128xbf16, #tpu.memory_space<vmem>>, vector<16x128xbf16>
    tpu.vector_store %arg7[%c0_6, %c0_7], %9 {strides = array<i32>} : memref<16x128xbf16, #tpu.memory_space<vmem>>, vector<16x128xbf16>,
    %11 = arith.truncf %8 : vector<16x128xf32> to vector<16x128xbf16>
    %c0_8 = arith.constant 0 : index
    %c0_9 = arith.constant 0 : index
    %12 = vector.load %arg4[%c0_8, %c0_9] : memref<128x128xbf16, #tpu.memory_space<vmem>>, vector<128x128xbf16>
    %cst_10 = arith.constant dense<0.000000e+00> : vector<16x128xf32>
    %13 = tpu.matmul %11, %12, %cst_10 {dimension_numbers = #tpu.dot_dimension_numbers<[1], [0], [0], [1], [0, 0, 1, 1], [], []>} : vector<16x128xbf16>, vector<128x128xbf16>, vector<16x128xf32> -> vector<16x128xf32>
    %c0_11 = arith.constant 0 : index
    %c0_12 = arith.constant 0 : index
    %14 = vector.load %arg5[%c0_11, %c0_12] : memref<1x128xf32, #tpu.memory_space<vmem>>, vector<1x128xf32>
    %15 = vector.broadcast %14 : vector<1x128xf32> to vector<16x128xf32>
    %16 = arith.addf %13, %15 : vector<16x128xf32>
    %c0_13 = arith.constant 0 : index
    %c0_14 = arith.constant 0 : index
    %17 = vector.load %arg6[%c0_13, %c0_14] : memref<16x128xf32, #tpu.memory_space<vmem>>, vector<16x128xf32>
    tpu.vector_store %arg6[%c0_13, %c0_14], %16 {strides = array<i32>} : memref<16x128xf32, #tpu.memory_space<vmem>>, vector<16x128xf32>,
    return
  }
  func.func @transform_0(%arg0: i32) -> (i32, i32) {
    %c0_i32 = arith.constant 0 : i32
    %c0_i32_0 = arith.constant 0 : i32
    return %arg0, %c0_i32 : i32, i32
  }
  func.func @transform_1(%arg0: i32) -> (i32, i32) {
    %c0_i32 = arith.constant 0 : i32
    %c0_i32_0 = arith.constant 0 : i32
    %c0_i32_1 = arith.constant 0 : i32
    return %c0_i32, %c0_i32_0 : i32, i32
  }
  func.func @transform_2(%arg0: i32) -> (i32, i32) {
    %c0_i32 = arith.constant 0 : i32
    %c0_i32_0 = arith.constant 0 : i32
    %c0_i32_1 = arith.constant 0 : i32
    return %c0_i32, %c0_i32_0 : i32, i32
  }
  func.func @transform_3(%arg0: i32) -> (i32, i32) {
    %c0_i32 = arith.constant 0 : i32
    %c0_i32_0 = arith.constant 0 : i32
    %c0_i32_1 = arith.constant 0 : i32
    return %c0_i32, %c0_i32_0 : i32, i32
  }
  func.func @transform_4(%arg0: i32) -> (i32, i32) {
    %c0_i32 = arith.constant 0 : i32
    %c0_i32_0 = arith.constant 0 : i32
    %c0_i32_1 = arith.constant 0 : i32
    return %c0_i32, %c0_i32_0 : i32, i32
  }
  func.func @transform_5(%arg0: i32) -> (i32, i32) {
    %c0_i32 = arith.constant 0 : i32
    %c0_i32_0 = arith.constant 0 : i32
    return %arg0, %c0_i32 : i32, i32
  }
  func.func @transform_6(%arg0: i32) -> (i32, i32) {
    %c0_i32 = arith.constant 0 : i32
    %c0_i32_0 = arith.constant 0 : i32
    return %arg0, %c0_i32 : i32, i32
  }
}

</mosaic_0001>

<llo_original>
// kernel: mnist_inception_forward.1
$region0: #{mnist_inception_forward.1}
  #allocation0 [shape = 'u32[]', space=smem, size = 0x4, offset = 0x4, fixed_abs, tag = 'smem constant byte address 0x4 - core index']
  #allocation1 [shape = 'u32[144,128]{1,0:T(1,128)}', space=vmem, size = 0x12000, scoped, tag = 'internal scratch']
  %s0 = inlined_call_operand.vmem [shape: f32[16,784], index: 0, kind: input, shape index: {}]
  %s1 = inlined_call_operand.hbm [shape: bf16[784,128], index: 1, kind: input, shape index: {}]
  %s2 = inlined_call_operand.vmem [shape: f32[1,128], index: 2, kind: input, shape index: {}]
  %s3 = inlined_call_operand.vmem [shape: bf16[128,128], index: 3, kind: input, shape index: {}]
  %s4 = inlined_call_operand.vmem [shape: f32[1,128], index: 4, kind: input, shape index: {}]
  %s5 = inlined_call_operand.vmem [shape: f32[16,128], index: 5, kind: output, shape index: {0}]
  %s6 = inlined_call_operand.vmem [shape: bf16[16,128], index: 6, kind: output, shape index: {1}]
  %7 = xla_tuple %s5, %s6
  %s8 = sld [smem:[#allocation0]]
  $region42: #{mnist_inception_forward.1} parent=0
    _
  %s10 = ssub.s32 1, %s8
  %s11 = scalar_select 0, %s10, %s8
  $region1: #{mnist_inception_forward.1} parent=0
    #allocation2 [shape = 'u8[200704]{0}', space=vmem, size = 0x31000, scoped, tag = 'input window, operand 1, single buffered']
    #allocation3 [shape = 's32[1]{0}', space=sflag, size = 0x4, scoped, tag = 'scoped memory for mnist_inception_forward.1']
    %12 = vsyncpa [#allocation3], 0
    // Predicated region
    $region2: #{mnist_inception_forward.1} parent=1 // pred_check
      _
    $region3: #{mnist_inception_forward.1} parent=1 // pred_check_branch
      %14 = sbr.rel (0) target = $region5
    $region4: #{mnist_inception_forward.1} parent=1 // pred_region
      _
    $region5: #{mnist_inception_forward.1} parent=1 // pred_fallthru
      _
    // Predicated region
    $region6: #{mnist_inception_forward.1} parent=1 // pred_check
      _
    $region7: #{mnist_inception_forward.1} parent=1 // pred_check_branch
      %16 = sbr.rel (0) target = $region9
    $region8: #{mnist_inception_forward.1} parent=1 // pred_region
      %s18 = ssub.s32 6272, 6272
      %19 = vsyncadd [#allocation3], %s18
      %s20 = sshll.u32 [#allocation2], 4
      %s21 = int_to_ptr.vmem [resolvable:$true] %s20
      %26 = dma.hbm_to_vmem [thread:$0]  %s1, 6272, %s21, [#allocation3], 64, 64, 4
    $region9: #{mnist_inception_forward.1} parent=1 // pred_fallthru
      _
    // Predicated region
    $region10: #{mnist_inception_forward.1} parent=1 // pred_check
      _
    $region11: #{mnist_inception_forward.1} parent=1 // pred_check_branch
      %28 = sbr.rel (0) target = $region13
    $region12: #{mnist_inception_forward.1} parent=1 // pred_region
      _
    $region13: #{mnist_inception_forward.1} parent=1 // pred_fallthru
      _
    // Predicated region
    $region14: #{mnist_inception_forward.1} parent=1 // pred_check
      _
    $region15: #{mnist_inception_forward.1} parent=1 // pred_check_branch
      %30 = sbr.rel (0) target = $region17
    $region16: #{mnist_inception_forward.1} parent=1 // pred_region
      _
    $region17: #{mnist_inception_forward.1} parent=1 // pred_fallthru
      _
    // Predicated region
    $region18: #{mnist_inception_forward.1} parent=1 // pred_check
      _
    $region19: #{mnist_inception_forward.1} parent=1 // pred_check_branch
      %32 = sbr.rel (0) target = $region21
    $region20: #{mnist_inception_forward.1} parent=1 // pred_region
      _
    $region21: #{mnist_inception_forward.1} parent=1 // pred_fallthru
      _
    // Predicated region
    $region22: #{mnist_inception_forward.1} parent=1 // pred_check
      _
    $region23: #{mnist_inception_forward.1} parent=1 // pred_check_branch
      %34 = sbr.rel (0) target = $region25
    $region24: #{mnist_inception_forward.1} parent=1 // pred_region
      %35 = dma.done [#allocation3], 6272
    $region25: #{mnist_inception_forward.1} parent=1 // pred_fallthru
      _
    %v37 = vld [vmem:[%s0] sm:$0xff]
    %v38 = vld [vmem:[%s0 + $0x8] sm:$0xff]
    %v39 = vld [vmem:[%s0 + $0x10] sm:$0xff]
    %v40 = vld [vmem:[%s0 + $0x18] sm:$0xff]
    %v41 = vld [vmem:[%s0 + $0x20] sm:$0xff]
    %v42 = vld [vmem:[%s0 + $0x28] sm:$0xff]
    %v43 = vld [vmem:[%s0 + $0x30] sm:$0xff]
    %v44 = vld [vmem:[%s0 + $0x38] sm:$0xff]
    %v45 = vld [vmem:[%s0 + $0x40] sm:$0xff]
    %v46 = vld [vmem:[%s0 + $0x48] sm:$0xff]
    %v47 = vld [vmem:[%s0 + $0x50] sm:$0xff]
    %v48 = vld [vmem:[%s0 + $0x58] sm:$0xff]
    %v49 = vld [vmem:[%s0 + $0x60] sm:$0xff]
    %v50 = vld [vmem:[%s0 + $0x68] sm:$0xff]
    %v51 = vpack.c.bf16 %v44, %v37
    %v52 = vpack.c.bf16 %v45, %v38
    %v53 = vpack.c.bf16 %v46, %v39
    %v54 = vpack.c.bf16 %v47, %v40
    %v55 = vpack.c.bf16 %v48, %v41
    %v56 = vpack.c.bf16 %v49, %v42
    %v57 = vpack.c.bf16 %v50, %v43
    %v58 = vld [vmem:[#allocation2] sm:$0xf]
    %v59 = vld [vmem:[#allocation2 + $0x4] sm:$0xf]
    %v60 = vld [vmem:[#allocation2 + $0x8] sm:$0xf]
    %v61 = vld [vmem:[#allocation2 + $0xc] sm:$0xf]
    %v62 = vld [vmem:[#allocation2 + $0x10] sm:$0xf]
    %v63 = vld [vmem:[#allocation2 + $0x14] sm:$0xf]
    %v64 = vld [vmem:[#allocation2 + $0x18] sm:$0xf]
    %v65 = vld [vmem:[#allocation2 + $0x1c] sm:$0xf]
    %v66 = vld [vmem:[#allocation2 + $0x20] sm:$0xf]
    %v67 = vld [vmem:[#allocation2 + $0x24] sm:$0xf]
    %v68 = vld [vmem:[#allocation2 + $0x28] sm:$0xf]
    %v69 = vld [vmem:[#allocation2 + $0x2c] sm:$0xf]
    %v70 = vld [vmem:[#allocation2 + $0x30] sm:$0xf]
    %v71 = vld [vmem:[#allocation2 + $0x34] sm:$0xf]
    %v72 = vld [vmem:[#allocation2 + $0x38] sm:$0xf]
    %v73 = vld [vmem:[#allocation2 + $0x3c] sm:$0xf]
    %v74 = vld [vmem:[#allocation2 + $0x40] sm:$0xf]
    %v75 = vld [vmem:[#allocation2 + $0x44] sm:$0xf]
    %v76 = vld [vmem:[#allocation2 + $0x48] sm:$0xf]
    %v77 = vld [vmem:[#allocation2 + $0x4c] sm:$0xf]
    %v78 = vld [vmem:[#allocation2 + $0x50] sm:$0xf]
    %v79 = vld [vmem:[#allocation2 + $0x54] sm:$0xf]
    %v80 = vld [vmem:[#allocation2 + $0x58] sm:$0xf]
    %v81 = vld [vmem:[#allocation2 + $0x5c] sm:$0xf]
    %v82 = vld [vmem:[#allocation2 + $0x60] sm:$0xf]
    %v83 = vld [vmem:[#allocation2 + $0x64] sm:$0xf]
    %v84 = vld [vmem:[#allocation2 + $0x68] sm:$0xf]
    %v85 = vld [vmem:[#allocation2 + $0x6c] sm:$0xf]
    %v86 = vld [vmem:[#allocation2 + $0x70] sm:$0xf]
    %v87 = vld [vmem:[#allocation2 + $0x74] sm:$0xf]
    %v88 = vld [vmem:[#allocation2 + $0x78] sm:$0xf]
    %v89 = vld [vmem:[#allocation2 + $0x7c] sm:$0xf]
    %v90 = vld [vmem:[#allocation2 + $0x80] sm:$0xf]
    %v91 = vld [vmem:[#allocation2 + $0x84] sm:$0xf]
    %v92 = vld [vmem:[#allocation2 + $0x88] sm:$0xf]
    %v93 = vld [vmem:[#allocation2 + $0x8c] sm:$0xf]
    %v94 = vld [vmem:[#allocation2 + $0x90] sm:$0xf]
    %v95 = vld [vmem:[#allocation2 + $0x94] sm:$0xf]
    %v96 = vld [vmem:[#allocation2 + $0x98] sm:$0xf]
    %v97 = vld [vmem:[#allocation2 + $0x9c] sm:$0xf]
    %v98 = vld [vmem:[#allocation2 + $0xa0] sm:$0xf]
    %v99 = vld [vmem:[#allocation2 + $0xa4] sm:$0xf]
    %v100 = vld [vmem:[#allocation2 + $0xa8] sm:$0xf]
    %v101 = vld [vmem:[#allocation2 + $0xac] sm:$0xf]
    %v102 = vld [vmem:[#allocation2 + $0xb0] sm:$0xf]
    %v103 = vld [vmem:[#allocation2 + $0xb4] sm:$0xf]
    %v104 = vld [vmem:[#allocation2 + $0xb8] sm:$0xf]
    %v105 = vld [vmem:[#allocation2 + $0xbc] sm:$0xf]
    %v106 = vld [vmem:[#allocation2 + $0xc0] sm:$0xf]
    %v107 = vld [vmem:[#allocation2 + $0xc4] sm:$0xf]
    %v108 = vld [vmem:[#allocation2 + $0xc8] sm:$0xf]
    %v109 = vld [vmem:[#allocation2 + $0xcc] sm:$0xf]
    %v110 = vld [vmem:[#allocation2 + $0xd0] sm:$0xf]
    %v111 = vld [vmem:[#allocation2 + $0xd4] sm:$0xf]
    %v112 = vld [vmem:[#allocation2 + $0xd8] sm:$0xf]
    %v113 = vld [vmem:[#allocation2 + $0xdc] sm:$0xf]
    %v114 = vld [vmem:[#allocation2 + $0xe0] sm:$0xf]
    %v115 = vld [vmem:[#allocation2 + $0xe4] sm:$0xf]
    %v116 = vld [vmem:[#allocation2 + $0xe8] sm:$0xf]
    %v117 = vld [vmem:[#allocation2 + $0xec] sm:$0xf]
    %v118 = vld [vmem:[#allocation2 + $0xf0] sm:$0xf]
    %v119 = vld [vmem:[#allocation2 + $0xf4] sm:$0xf]
    %v120 = vld [vmem:[#allocation2 + $0xf8] sm:$0xf]
    %v121 = vld [vmem:[#allocation2 + $0xfc] sm:$0xf]
    %v122 = vld [vmem:[#allocation2 + $0x100] sm:$0xf]
    %v123 = vld [vmem:[#allocation2 + $0x104] sm:$0xf]
    %v124 = vld [vmem:[#allocation2 + $0x108] sm:$0xf]
    %v125 = vld [vmem:[#allocation2 + $0x10c] sm:$0xf]
    %v126 = vld [vmem:[#allocation2 + $0x110] sm:$0xf]
    %v127 = vld [vmem:[#allocation2 + $0x114] sm:$0xf]
    %v128 = vld [vmem:[#allocation2 + $0x118] sm:$0xf]
    %v129 = vld [vmem:[#allocation2 + $0x11c] sm:$0xf]
    %v130 = vld [vmem:[#allocation2 + $0x120] sm:$0xf]
    %v131 = vld [vmem:[#allocation2 + $0x124] sm:$0xf]
    %v132 = vld [vmem:[#allocation2 + $0x128] sm:$0xf]
    %v133 = vld [vmem:[#allocation2 + $0x12c] sm:$0xf]
    %v134 = vld [vmem:[#allocation2 + $0x130] sm:$0xf]
    %v135 = vld [vmem:[#allocation2 + $0x134] sm:$0xf]
    %v136 = vld [vmem:[#allocation2 + $0x138] sm:$0xf]
    %v137 = vld [vmem:[#allocation2 + $0x13c] sm:$0xf]
    %v138 = vld [vmem:[#allocation2 + $0x140] sm:$0xf]
    %v139 = vld [vmem:[#allocation2 + $0x144] sm:$0xf]
    %v140 = vld [vmem:[#allocation2 + $0x148] sm:$0xf]
    %v141 = vld [vmem:[#allocation2 + $0x14c] sm:$0xf]
    %v142 = vld [vmem:[#allocation2 + $0x150] sm:$0xf]
    %v143 = vld [vmem:[#allocation2 + $0x154] sm:$0xf]
    %v144 = vld [vmem:[#allocation2 + $0x158] sm:$0xf]
    %v145 = vld [vmem:[#allocation2 + $0x15c] sm:$0xf]
    %v146 = vld [vmem:[#allocation2 + $0x160] sm:$0xf]
    %v147 = vld [vmem:[#allocation2 + $0x164] sm:$0xf]
    %v148 = vld [vmem:[#allocation2 + $0x168] sm:$0xf]
    %v149 = vld [vmem:[#allocation2 + $0x16c] sm:$0xf]
    %v150 = vld [vmem:[#allocation2 + $0x170] sm:$0xf]
    %v151 = vld [vmem:[#allocation2 + $0x174] sm:$0xf]
    %v152 = vld [vmem:[#allocation2 + $0x178] sm:$0xf]
    %v153 = vld [vmem:[#allocation2 + $0x17c] sm:$0xf]
    %v154 = vld [vmem:[#allocation2 + $0x180] sm:$0xf]
    %v155 = vld [vmem:[#allocation2 + $0x184] sm:$0xf]
    %v156 = vld [vmem:[%s2] sm:$0x1]
    %v158 = vlaneseq
    %v159 = vshrl.u32 %v158, 7
    %v160 = vsub.s32 0, %v159
    %v161 = vrot.slane %v156, %v160
    %v261 = vunpack.c.l.b16 %v58
    %v262 = vunpack.c.l.b16 %v59
    %v263 = vunpack.c.l.b16 %v60
    %v264 = vunpack.c.l.b16 %v61
    %v265 = vunpack.c.l.b16 %v62
    %v266 = vunpack.c.l.b16 %v63
    %v267 = vunpack.c.l.b16 %v64
    %v268 = vunpack.c.l.b16 %v65
    %v269 = vunpack.c.l.b16 %v66
    %v270 = vunpack.c.l.b16 %v67
    %v271 = vunpack.c.l.b16 %v68
    %v272 = vunpack.c.l.b16 %v69
    %v273 = vunpack.c.l.b16 %v70
    %v274 = vunpack.c.l.b16 %v71
    %v275 = vunpack.c.l.b16 %v72
    %v276 = vunpack.c.l.b16 %v73
    %v277 = vunpack.c.l.b16 %v74
    %v278 = vunpack.c.l.b16 %v75
    %v279 = vunpack.c.l.b16 %v76
    %v280 = vunpack.c.l.b16 %v77
    %v281 = vunpack.c.l.b16 %v78
    %v282 = vunpack.c.l.b16 %v79
    %v283 = vunpack.c.l.b16 %v80
    %v284 = vunpack.c.l.b16 %v81
    %v285 = vunpack.c.l.b16 %v82
    %v286 = vunpack.c.l.b16 %v83
    %v287 = vunpack.c.l.b16 %v84
    %v288 = vunpack.c.l.b16 %v85
    %v289 = vunpack.c.l.b16 %v86
    %v290 = vunpack.c.l.b16 %v87
    %v291 = vunpack.c.l.b16 %v88
    %v292 = vunpack.c.l.b16 %v89
    %v293 = vunpack.c.l.b16 %v90
    %v294 = vunpack.c.l.b16 %v91
    %v295 = vunpack.c.l.b16 %v92
    %v296 = vunpack.c.l.b16 %v93
    %v297 = vunpack.c.l.b16 %v94
    %v298 = vunpack.c.l.b16 %v95
    %v299 = vunpack.c.l.b16 %v96
    %v300 = vunpack.c.l.b16 %v97
    %v301 = vunpack.c.l.b16 %v98
    %v302 = vunpack.c.l.b16 %v99
    %v303 = vunpack.c.l.b16 %v100
    %v304 = vunpack.c.l.b16 %v101
    %v305 = vunpack.c.l.b16 %v102
    %v306 = vunpack.c.l.b16 %v103
    %v307 = vunpack.c.l.b16 %v104
    %v308 = vunpack.c.l.b16 %v105
    %v309 = vunpack.c.l.b16 %v106
    %v310 = vunpack.c.l.b16 %v107
    %v311 = vunpack.c.l.b16 %v108
    %v312 = vunpack.c.l.b16 %v109
    %v313 = vunpack.c.l.b16 %v110
    %v314 = vunpack.c.l.b16 %v111
    %v315 = vunpack.c.l.b16 %v112
    %v316 = vunpack.c.l.b16 %v113
    %v317 = vunpack.c.l.b16 %v114
    %v318 = vunpack.c.l.b16 %v115
    %v319 = vunpack.c.l.b16 %v116
    %v320 = vunpack.c.l.b16 %v117
    %v321 = vunpack.c.l.b16 %v118
    %v322 = vunpack.c.l.b16 %v119
    %v323 = vunpack.c.l.b16 %v120
    %v324 = vunpack.c.l.b16 %v121
    %v325 = vunpack.c.l.b16 %v122
    %v326 = vunpack.c.l.b16 %v123
    %v327 = vunpack.c.l.b16 %v124
    %v328 = vunpack.c.l.b16 %v125
    %v329 = vunpack.c.l.b16 %v126
    %v330 = vunpack.c.l.b16 %v127
    %v331 = vunpack.c.l.b16 %v128
    %v332 = vunpack.c.l.b16 %v129
    %v333 = vunpack.c.l.b16 %v130
    %v334 = vunpack.c.l.b16 %v131
    %v335 = vunpack.c.l.b16 %v132
    %v336 = vunpack.c.l.b16 %v133
    %v337 = vunpack.c.l.b16 %v134
    %v338 = vunpack.c.l.b16 %v135
    %v339 = vunpack.c.l.b16 %v136
    %v340 = vunpack.c.l.b16 %v137
    %v341 = vunpack.c.l.b16 %v138
    %v342 = vunpack.c.l.b16 %v139
    %v343 = vunpack.c.l.b16 %v140
    %v344 = vunpack.c.l.b16 %v141
    %v345 = vunpack.c.l.b16 %v142
    %v346 = vunpack.c.l.b16 %v143
    %v347 = vunpack.c.l.b16 %v144
    %v348 = vunpack.c.l.b16 %v145
    %v349 = vunpack.c.l.b16 %v146
    %v350 = vunpack.c.l.b16 %v147
    %v351 = vunpack.c.l.b16 %v148
    %v352 = vunpack.c.l.b16 %v149
    %v353 = vunpack.c.l.b16 %v150
    %v354 = vunpack.c.l.b16 %v151
    %v355 = vunpack.c.l.b16 %v152
    %v356 = vunpack.c.l.b16 %v153
    %v357 = vunpack.c.l.b16 %v154
    %v358 = vunpack.c.l.b16 %v155
    %v359 = vpack.c.b16 %v262, %v261
    %v360 = vpack.c.b16 %v264, %v263
    %v361 = vpack.c.b16 %v266, %v265
    %v362 = vpack.c.b16 %v268, %v267
    %v363 = vpack.c.b16 %v270, %v269
    %v364 = vpack.c.b16 %v272, %v271
    %v365 = vpack.c.b16 %v274, %v273
    %v366 = vpack.c.b16 %v276, %v275
    %v367 = vpack.c.b16 %v278, %v277
    %v368 = vpack.c.b16 %v280, %v279
    %v369 = vpack.c.b16 %v282, %v281
    %v370 = vpack.c.b16 %v284, %v283
    %v371 = vpack.c.b16 %v286, %v285
    %v372 = vpack.c.b16 %v288, %v287
    %v373 = vpack.c.b16 %v290, %v289
    %v374 = vpack.c.b16 %v292, %v291
    %v375 = vpack.c.b16 %v294, %v293
    %v376 = vpack.c.b16 %v296, %v295
    %v377 = vpack.c.b16 %v298, %v297
    %v378 = vpack.c.b16 %v300, %v299
    %v379 = vpack.c.b16 %v302, %v301
    %v380 = vpack.c.b16 %v304, %v303
    %v381 = vpack.c.b16 %v306, %v305
    %v382 = vpack.c.b16 %v308, %v307
    %v383 = vpack.c.b16 %v310, %v309
    %v384 = vpack.c.b16 %v312, %v311
    %v385 = vpack.c.b16 %v314, %v313
    %v386 = vpack.c.b16 %v316, %v315
    %v387 = vpack.c.b16 %v318, %v317
    %v388 = vpack.c.b16 %v320, %v319
    %v389 = vpack.c.b16 %v322, %v321
    %v390 = vpack.c.b16 %v324, %v323
    %v391 = vpack.c.b16 %v326, %v325
    %v392 = vpack.c.b16 %v328, %v327
    %v393 = vpack.c.b16 %v330, %v329
    %v394 = vpack.c.b16 %v332, %v331
    %v395 = vpack.c.b16 %v334, %v333
    %v396 = vpack.c.b16 %v336, %v335
    %v397 = vpack.c.b16 %v338, %v337
    %v398 = vpack.c.b16 %v340, %v339
    %v399 = vpack.c.b16 %v342, %v341
    %v400 = vpack.c.b16 %v344, %v343
    %v401 = vpack.c.b16 %v346, %v345
    %v402 = vpack.c.b16 %v348, %v347
    %v403 = vpack.c.b16 %v350, %v349
    %v404 = vpack.c.b16 %v352, %v351
    %v405 = vpack.c.b16 %v354, %v353
    %v406 = vpack.c.b16 %v356, %v355
    %v407 = vpack.c.b16 %v358, %v357
    %vm457 = vcmask 130048
    %v459 = vsel %vm457, %v57, 0
    %461 = vmatprep.subr.bf16.mxu0 0
    %462 = vmatpush1.bf16.msra.mxu0 %v359
    %463 = vmatprep.subr.bf16.mxu0 0
    %464 = vmatpush1.bf16.msra.mxu0 %v360
    %465 = vmatprep.subr.bf16.mxu0 0
    %466 = vmatpush1.bf16.msra.mxu0 %v361
    %467 = vmatprep.subr.bf16.mxu0 0
    %468 = vmatpush1.bf16.msra.mxu0 %v362
    %469 = vmatprep.subr.bf16.mxu0 0
    %470 = vmatpush1.bf16.msra.mxu0 %v363
    %471 = vmatprep.subr.bf16.mxu0 0
    %472 = vmatpush1.bf16.msra.mxu0 %v364
    %473 = vmatprep.subr.bf16.mxu0 0
    %474 = vmatpush1.bf16.msra.mxu0 %v365
    %475 = vmatprep.subr.bf16.mxu0 0
    %476 = vmatpush1.bf16.msra.mxu0 %v366
    %477 = vmatprep.subr.bf16.mxu0 0
    %478 = vmatpush1.bf16.msra.mxu0 %v367
    %479 = vmatprep.subr.bf16.mxu0 0
    %480 = vmatpush1.bf16.msra.mxu0 %v368
    %481 = vmatprep.subr.bf16.mxu0 0
    %482 = vmatpush1.bf16.msra.mxu0 %v369
    %483 = vmatprep.subr.bf16.mxu0 0
    %484 = vmatpush1.bf16.msra.mxu0 %v370
    %485 = vmatprep.subr.bf16.mxu0 0
    %486 = vmatpush1.bf16.msra.mxu0 %v371
    %487 = vmatprep.subr.bf16.mxu0 0
    %488 = vmatpush1.bf16.msra.mxu0 %v372
    %489 = vmatprep.subr.bf16.mxu0 0
    %490 = vmatpush1.bf16.msra.mxu0 %v373
    %491 = vmatprep.subr.bf16.mxu0 0
    %492 = vmatpush1.bf16.msra.mxu0 %v374
    %493 = vmatprep.mubr.bf16.mxu0 %v52
    %494 = vmatmul.mubr.bf16.gmra.mrb[0].mxu0 %v51
    %v495 = vpop.f32.mrb[0].mxu0
    %v496 = vadd.f32 %v161, %v495
    %v497 = vpop.f32.mrb[0].mxu0
    %v498 = vpop.f32.mrb[0].mxu0
    %v499 = vadd.f32 %v161, %v498
    %v500 = vpop.f32.mrb[0].mxu0
    %501 = vdwg.mxu0
    %502 = vmatprep.subr.bf16.mxu0 0
    %503 = vmatpush1.bf16.msra.mxu0 %v375
    %504 = vmatprep.subr.bf16.mxu0 0
    %505 = vmatpush1.bf16.msra.mxu0 %v376
    %506 = vmatprep.subr.bf16.mxu0 0
    %507 = vmatpush1.bf16.msra.mxu0 %v377
    %508 = vmatprep.subr.bf16.mxu0 0
    %509 = vmatpush1.bf16.msra.mxu0 %v378
    %510 = vmatprep.subr.bf16.mxu0 0
    %511 = vmatpush1.bf16.msra.mxu0 %v379
    %512 = vmatprep.subr.bf16.mxu0 0
    %513 = vmatpush1.bf16.msra.mxu0 %v380
    %514 = vmatprep.subr.bf16.mxu0 0
    %515 = vmatpush1.bf16.msra.mxu0 %v381
    %516 = vmatprep.subr.bf16.mxu0 0
    %517 = vmatpush1.bf16.msra.mxu0 %v382
    %518 = vmatprep.subr.bf16.mxu0 0
    %519 = vmatpush1.bf16.msra.mxu0 %v383
    %520 = vmatprep.subr.bf16.mxu0 0
    %521 = vmatpush1.bf16.msra.mxu0 %v384
    %522 = vmatprep.subr.bf16.mxu0 0
    %523 = vmatpush1.bf16.msra.mxu0 %v385
    %524 = vmatprep.subr.bf16.mxu0 0
    %525 = vmatpush1.bf16.msra.mxu0 %v386
    %526 = vmatprep.subr.bf16.mxu0 0
    %527 = vmatpush1.bf16.msra.mxu0 %v387
    %528 = vmatprep.subr.bf16.mxu0 0
    %529 = vmatpush1.bf16.msra.mxu0 %v388
    %530 = vmatprep.subr.bf16.mxu0 0
    %531 = vmatpush1.bf16.msra.mxu0 %v389
    %532 = vmatprep.subr.bf16.mxu0 0
    %533 = vmatpush1.bf16.msra.mxu0 %v390
    %534 = vmatprep.mubr.bf16.mxu0 %v54
    %535 = vmatmul.mubr.bf16.gmra.mrb[0].mxu0 %v53
    %v536 = vpop.f32.mrb[0].mxu0
    %v537 = vadd.f32 %v496, %v536
    %v538 = vpop.f32.mrb[0].mxu0
    %v539 = vpop.f32.mrb[0].mxu0
    %v540 = vadd.f32 %v499, %v539
    %v541 = vpop.f32.mrb[0].mxu0
    %542 = vdwg.mxu0
    %543 = vmatprep.subr.bf16.mxu0 0
    %544 = vmatpush1.bf16.msra.mxu0 %v391
    %545 = vmatprep.subr.bf16.mxu0 0
    %546 = vmatpush1.bf16.msra.mxu0 %v392
    %547 = vmatprep.subr.bf16.mxu0 0
    %548 = vmatpush1.bf16.msra.mxu0 %v393
    %549 = vmatprep.subr.bf16.mxu0 0
    %550 = vmatpush1.bf16.msra.mxu0 %v394
    %551 = vmatprep.subr.bf16.mxu0 0
    %552 = vmatpush1.bf16.msra.mxu0 %v395
    %553 = vmatprep.subr.bf16.mxu0 0
    %554 = vmatpush1.bf16.msra.mxu0 %v396
    %555 = vmatprep.subr.bf16.mxu0 0
    %556 = vmatpush1.bf16.msra.mxu0 %v397
    %557 = vmatprep.subr.bf16.mxu0 0
    %558 = vmatpush1.bf16.msra.mxu0 %v398
    %559 = vmatprep.subr.bf16.mxu0 0
    %560 = vmatpush1.bf16.msra.mxu0 %v399
    %561 = vmatprep.subr.bf16.mxu0 0
    %562 = vmatpush1.bf16.msra.mxu0 %v400
    %563 = vmatprep.subr.bf16.mxu0 0
    %564 = vmatpush1.bf16.msra.mxu0 %v401
    %565 = vmatprep.subr.bf16.mxu0 0
    %566 = vmatpush1.bf16.msra.mxu0 %v402
    %567 = vmatprep.subr.bf16.mxu0 0
    %568 = vmatpush1.bf16.msra.mxu0 %v403
    %569 = vmatprep.subr.bf16.mxu0 0
    %570 = vmatpush1.bf16.msra.mxu0 %v404
    %571 = vmatprep.subr.bf16.mxu0 0
    %572 = vmatpush1.bf16.msra.mxu0 %v405
    %573 = vmatprep.subr.bf16.mxu0 0
    %574 = vmatpush1.bf16.msra.mxu0 %v406
    %575 = vmatprep.mubr.bf16.mxu0 %v56
    %576 = vmatmul.mubr.bf16.gmra.mrb[0].mxu0 %v55
    %v577 = vpop.f32.mrb[0].mxu0
    %v578 = vadd.f32 %v537, %v577
    %v579 = vpop.f32.mrb[0].mxu0
    %v580 = vpop.f32.mrb[0].mxu0
    %v581 = vadd.f32 %v540, %v580
    %v582 = vpop.f32.mrb[0].mxu0
    %583 = vdwg.mxu0
    %584 = vmatprep.subr.bf16.mxu0 0
    %585 = vmatpush1.bf16.msra.mxu0 %v407
    %586 = vmatprep.subr.bf16.mxu0 0
    %587 = vmatpush1.bf16.msra.mxu0 0
    %588 = vmatprep.subr.bf16.mxu0 0
    %589 = vmatpush1.bf16.msra.mxu0 0
    %590 = vmatprep.subr.bf16.mxu0 0
    %591 = vmatpush1.bf16.msra.mxu0 0
    %592 = vmatprep.subr.bf16.mxu0 0
    %593 = vmatpush1.bf16.msra.mxu0 0
    %594 = vmatprep.subr.bf16.mxu0 0
    %595 = vmatpush1.bf16.msra.mxu0 0
    %596 = vmatprep.subr.bf16.mxu0 0
    %597 = vmatpush1.bf16.msra.mxu0 0
    %598 = vmatprep.subr.bf16.mxu0 0
    %599 = vmatpush1.bf16.msra.mxu0 0
    %600 = vmatprep.subr.bf16.mxu0 0
    %601 = vmatpush1.bf16.msra.mxu0 0
    %602 = vmatprep.subr.bf16.mxu0 0
    %603 = vmatpush1.bf16.msra.mxu0 0
    %604 = vmatprep.subr.bf16.mxu0 0
    %605 = vmatpush1.bf16.msra.mxu0 0
    %606 = vmatprep.subr.bf16.mxu0 0
    %607 = vmatpush1.bf16.msra.mxu0 0
    %608 = vmatprep.subr.bf16.mxu0 0
    %609 = vmatpush1.bf16.msra.mxu0 0
    %610 = vmatprep.subr.bf16.mxu0 0
    %611 = vmatpush1.bf16.msra.mxu0 0
    %612 = vmatprep.subr.bf16.mxu0 0
    %613 = vmatpush1.bf16.msra.mxu0 0
    %614 = vmatprep.subr.bf16.mxu0 0
    %615 = vmatpush1.bf16.msra.mxu0 0
    %616 = vmatprep.mubr.bf16.mxu0 0
    %617 = vmatmul.mubr.bf16.gmra.mrb[0].mxu0 %v459
    %v618 = vpop.f32.mrb[0].mxu0
    %v619 = vadd.f32 %v578, %v618
    %v620 = vpop.f32.mrb[0].mxu0
    %v621 = vpop.f32.mrb[0].mxu0
    %v622 = vadd.f32 %v581, %v621
    %v623 = vpop.f32.mrb[0].mxu0
    %624 = vdwg.mxu0
    %v625 = vmax.f32 %v619, 0.0
    %v626 = vmax.f32 %v622, 0.0
    %v627 = vpack.c.bf16 %v626, %v625
    %v629 = vunpack.c.l.b16 %v627
    %v630 = vunpack.c.h.b16 %v627
    %v631 = vpack.c.b16 %v629, %v629
    %v632 = vpack.c.b16 %v630, %v630
    %635 = vst [vmem:[%s6] sm:$0xf] %v631
    %636 = vst [vmem:[%s6 + $0x4] sm:$0xf] %v632
    %v637 = vld [vmem:[%s3] sm:$0xf]
    %v638 = vld [vmem:[%s3 + $0x4] sm:$0xf]
    %v639 = vld [vmem:[%s3 + $0x8] sm:$0xf]
    %v640 = vld [vmem:[%s3 + $0xc] sm:$0xf]
    %v641 = vld [vmem:[%s3 + $0x10] sm:$0xf]
    %v642 = vld [vmem:[%s3 + $0x14] sm:$0xf]
    %v643 = vld [vmem:[%s3 + $0x18] sm:$0xf]
    %v644 = vld [vmem:[%s3 + $0x1c] sm:$0xf]
    %v645 = vld [vmem:[%s3 + $0x20] sm:$0xf]
    %v646 = vld [vmem:[%s3 + $0x24] sm:$0xf]
    %v647 = vld [vmem:[%s3 + $0x28] sm:$0xf]
    %v648 = vld [vmem:[%s3 + $0x2c] sm:$0xf]
    %v649 = vld [vmem:[%s3 + $0x30] sm:$0xf]
    %v650 = vld [vmem:[%s3 + $0x34] sm:$0xf]
    %v651 = vld [vmem:[%s3 + $0x38] sm:$0xf]
    %v652 = vld [vmem:[%s3 + $0x3c] sm:$0xf]
    %v653 = vld [vmem:[%s4] sm:$0x1]
    %v655 = vlaneseq
    %v656 = vshrl.u32 %v655, 7
    %v657 = vsub.s32 0, %v656
    %v658 = vrot.slane %v653, %v657
    %v676 = vunpack.c.l.b16 %v637
    %v677 = vunpack.c.l.b16 %v638
    %v678 = vunpack.c.l.b16 %v639
    %v679 = vunpack.c.l.b16 %v640
    %v680 = vunpack.c.l.b16 %v641
    %v681 = vunpack.c.l.b16 %v642
    %v682 = vunpack.c.l.b16 %v643
    %v683 = vunpack.c.l.b16 %v644
    %v684 = vunpack.c.l.b16 %v645
    %v685 = vunpack.c.l.b16 %v646
    %v686 = vunpack.c.l.b16 %v647
    %v687 = vunpack.c.l.b16 %v648
    %v688 = vunpack.c.l.b16 %v649
    %v689 = vunpack.c.l.b16 %v650
    %v690 = vunpack.c.l.b16 %v651
    %v691 = vunpack.c.l.b16 %v652
    %v692 = vpack.c.b16 %v677, %v676
    %v693 = vpack.c.b16 %v679, %v678
    %v694 = vpack.c.b16 %v681, %v680
    %v695 = vpack.c.b16 %v683, %v682
    %v696 = vpack.c.b16 %v685, %v684
    %v697 = vpack.c.b16 %v687, %v686
    %v698 = vpack.c.b16 %v689, %v688
    %v699 = vpack.c.b16 %v691, %v690
    %708 = vmatprep.subr.bf16.mxu0 0
    %709 = vmatpush1.bf16.msra.mxu0 %v692
    %710 = vmatprep.subr.bf16.mxu0 0
    %711 = vmatpush1.bf16.msra.mxu0 %v693
    %712 = vmatprep.subr.bf16.mxu0 0
    %713 = vmatpush1.bf16.msra.mxu0 %v694
    %714 = vmatprep.subr.bf16.mxu0 0
    %715 = vmatpush1.bf16.msra.mxu0 %v695
    %716 = vmatprep.subr.bf16.mxu0 0
    %717 = vmatpush1.bf16.msra.mxu0 %v696
    %718 = vmatprep.subr.bf16.mxu0 0
    %719 = vmatpush1.bf16.msra.mxu0 %v697
    %720 = vmatprep.subr.bf16.mxu0 0
    %721 = vmatpush1.bf16.msra.mxu0 %v698
    %722 = vmatprep.subr.bf16.mxu0 0
    %723 = vmatpush1.bf16.msra.mxu0 %v699
    %724 = vmatprep.subr.bf16.mxu0 0
    %725 = vmatpush1.bf16.msra.mxu0 0
    %726 = vmatprep.subr.bf16.mxu0 0
    %727 = vmatpush1.bf16.msra.mxu0 0
    %728 = vmatprep.subr.bf16.mxu0 0
    %729 = vmatpush1.bf16.msra.mxu0 0
    %730 = vmatprep.subr.bf16.mxu0 0
    %731 = vmatpush1.bf16.msra.mxu0 0
    %732 = vmatprep.subr.bf16.mxu0 0
    %733 = vmatpush1.bf16.msra.mxu0 0
    %734 = vmatprep.subr.bf16.mxu0 0
    %735 = vmatpush1.bf16.msra.mxu0 0
    %736 = vmatprep.subr.bf16.mxu0 0
    %737 = vmatpush1.bf16.msra.mxu0 0
    %738 = vmatprep.subr.bf16.mxu0 0
    %739 = vmatpush1.bf16.msra.mxu0 0
    %740 = vmatprep.mubr.bf16.mxu0 0
    %741 = vmatmul.mubr.bf16.gmra.mrb[0].mxu0 %v627
    %v742 = vpop.f32.mrb[0].mxu0
    %v743 = vadd.f32 %v658, %v742
    %v744 = vpop.f32.mrb[0].mxu0
    %v745 = vpop.f32.mrb[0].mxu0
    %v746 = vadd.f32 %v658, %v745
    %v747 = vpop.f32.mrb[0].mxu0
    %748 = vdwg.mxu0
    %749 = vst [vmem:[%s5] sm:$0xff] %v743
    %750 = vst [vmem:[%s5 + $0x8] sm:$0xff] %v746
    // Predicated region
    $region26: #{mnist_inception_forward.1} parent=1 // pred_check
      _
    $region27: #{mnist_inception_forward.1} parent=1 // pred_check_branch
      %752 = sbr.rel (0) target = $region29
    $region28: #{mnist_inception_forward.1} parent=1 // pred_region
      _
    $region29: #{mnist_inception_forward.1} parent=1 // pred_fallthru
      _
    // Predicated region
    $region30: #{mnist_inception_forward.1} parent=1 // pred_check
      _
    $region31: #{mnist_inception_forward.1} parent=1 // pred_check_branch
      %754 = sbr.rel (0) target = $region33
    $region32: #{mnist_inception_forward.1} parent=1 // pred_region
      _
    $region33: #{mnist_inception_forward.1} parent=1 // pred_fallthru
      _
    // Predicated region
    $region34: #{mnist_inception_forward.1} parent=1 // pred_check
      _
    $region35: #{mnist_inception_forward.1} parent=1 // pred_check_branch
      %756 = sbr.rel (0) target = $region37
    $region36: #{mnist_inception_forward.1} parent=1 // pred_region
      _
    $region37: #{mnist_inception_forward.1} parent=1 // pred_fallthru
      _
    // Predicated region
    $region38: #{mnist_inception_forward.1} parent=1 // pred_check
      _
    $region39: #{mnist_inception_forward.1} parent=1 // pred_check_branch
      %758 = sbr.rel (0) target = $region41
    $region40: #{mnist_inception_forward.1} parent=1 // pred_region
      _
    $region41: #{mnist_inception_forward.1} parent=1 // pred_fallthru
      _
    %759 = vsyncpa [#allocation3], 1

</llo_original>
